<compile_context>
chip_gen: v6e
topology: v6e:2x2x1
jax: 0.10.0
libtpu: 0.0.40
codegen_flags: <defaults>
</compile_context>

<pallas_src>
import functools

import jax
import jax.numpy as jnp
import numpy as np
from jax import lax
from jax.experimental import pallas as pl
from jax.experimental.pallas import tpu as pltpu


def block_kernel(x_ref, w_ref, b_ref, o_ref, pad_ref, *, H, W, K):
    """One image plane of the residual ELU-conv block (pixel axis = lanes).

    x_ref   : (Cin, H*W)          f32  raw input plane (NCHW is spatial-minor)
    w_ref   : (K*K, Cout, Cin)    f32  weight-normalized conv taps (resident)
    b_ref   : (Cout, 1)           f32  conv bias
    o_ref   : (Cout, H*W)         f32  output plane
    pad_ref : (Cin, H*W + 2W + 2) f32  VMEM scratch: ELU(x) with zero halo
    """
    HW = H * W
    Cin = x_ref.shape[0]
    Cout = o_ref.shape[0]

    x = x_ref[...]                                           # (Cin, HW) f32
    # In-kernel ELU (alpha=1); exp(min(x,0)) avoids inf intermediates.
    a = jnp.where(x > 0.0, x, jnp.exp(jnp.minimum(x, 0.0)) - 1.0)

    # Zero halo of W+1 pixels on both ends of the flattened pixel axis: every
    # conv tap then becomes a constant lane shift of one VMEM buffer.  The
    # halo absorbs the kh row under/overflow (ELU(0) == 0 keeps it exact).
    pad_ref[...] = jnp.zeros_like(pad_ref)
    pad_ref[:, pl.ds(W + 1, HW)] = a
    ap = pad_ref[...]                                        # (Cin, HW+2W+2)

    # Column index of each output pixel; masks the row wrap-around of the
    # kw = 0 / kw = K-1 taps.
    col = lax.broadcasted_iota(jnp.int32, (Cin, HW), 1) % W

    acc = jnp.zeros((Cout, HW), jnp.float32)
    for kh in range(K):
        for kw in range(K):
            off = kh * W + kw                                # static shift
            t = ap[:, off:off + HW]                          # (Cin, HW)
            if kw == 0:
                t = jnp.where(col > 0, t, 0.0)
            elif kw == K - 1:
                t = jnp.where(col < W - 1, t, 0.0)
            wk = w_ref[kh * K + kw]                          # (Cout, Cin) f32
            # Tiny channel count: VPU broadcast-FMA + sublane reduce instead
            # of 9 under-filled MXU matmuls (kernel is HBM-bound anyway).
            acc = acc + jnp.sum(wk[:, :, None] * t[None, :, :], axis=1)

    # Residual + bias, all f32 (v5e has no bf16 VPU; keeps numerics tight).
    o_ref[...] = x + acc + b_ref[...]


def block_forward(x_nchw, v, g, b):
    """Pallas implementation of `block.forward` (NCHW in, NCHW out)."""
    N, Cin, H, W = x_nchw.shape
    Cout, vin, K, K2 = v.shape
    assert K == 3 and K2 == 3, "block uses a 3x3 conv (stride=1, padding=1)"
    assert vin == Cin and Cout == Cin, "residual add needs matching channels"
    HW = H * W
    HWp = HW + 2 * (W + 1)                     # zero halo of W+1 px per side

    # --- weight_norm (PyTorch default dim=0): w = g * v / ||v||_(1,2,3) ---
    v32 = v.astype(jnp.float32)
    norm = jnp.sqrt(jnp.sum(v32 * v32, axis=(1, 2, 3)))
    w = v32 * (g.astype(jnp.float32) / norm)[:, None, None, None]  # (Co,Ci,K,K)
    # (K*K, Cout, Cin), f32: resident in VMEM, bandwidth-free, full precision.
    w_taps = jnp.transpose(w, (2, 3, 0, 1)).reshape(K * K, Cout, Cin)

    # NCHW is already spatial-minor: a free reshape puts the pixel axis on the
    # lane dimension.  No transpose, no HBM ELU pass, no HBM im2col, no pad.
    x_flat = x_nchw.reshape(N, Cin, HW).astype(jnp.float32)
    b2 = b.reshape(Cout, 1).astype(jnp.float32)

    kern = functools.partial(block_kernel, H=H, W=W, K=K)

    cost = pl.CostEstimate(
        flops=2 * N * HW * K * K * Cin * Cout,
        transcendentals=N * Cin * HW,                 # in-kernel ELU
        bytes_accessed=(N * Cin * HW * 4 + N * Cout * HW * 4
                        + K * K * Cout * Cin * 4 + Cout * 4))

    out_flat = pl.pallas_call(
        kern,
        out_shape=jax.ShapeDtypeStruct((N, Cout, HW), jnp.float32),
        grid=(N,),
        in_specs=[
            pl.BlockSpec((None, Cin, HW), lambda n: (n, 0, 0)),      # x plane
            pl.BlockSpec((K * K, Cout, Cin), lambda n: (0, 0, 0)),   # weights
            pl.BlockSpec((Cout, 1), lambda n: (0, 0)),               # bias
        ],
        out_specs=pl.BlockSpec((None, Cout, HW), lambda n: (n, 0, 0)),
        scratch_shapes=[pltpu.VMEM((Cin, HWp), jnp.float32)],
        compiler_params=pltpu.CompilerParams(
            dimension_semantics=("parallel",),        # megacore on v7x (N>=2)
            vmem_limit_bytes=32 * 1024 * 1024),       # safe on v5e/v6e/v7x
        cost_estimate=cost,
    )(x_flat, w_taps, b2)

    return out_flat.reshape(N, Cout, H, W)


def block_forward_ref(x_nchw, v, g, b, *, padding=1):
    """Pure-JAX reference (mirrors the PyTorch semantics)."""
    norm = jnp.sqrt(jnp.sum(v ** 2, axis=(1, 2, 3)))
    w = v * (g / norm)[:, None, None, None]
    a = jnp.where(x_nchw > 0, x_nchw, jnp.expm1(x_nchw))    # ELU
    y = lax.conv_general_dilated(
        a, w, window_strides=(1, 1),
        padding=[(padding, padding), (padding, padding)],
        dimension_numbers=("NCHW", "OIHW", "NCHW"),
        precision=lax.Precision.HIGHEST)
    return x_nchw + y + b[None, :, None, None]


if __name__ == "__main__":
    key = jax.random.PRNGKey(0)
    k1, k2, k3, k4 = jax.random.split(key, 4)
    N, C, H, W = 2, 4, 16, 16       # input_size == output_size == 4
    K = 3

    x = jax.random.normal(k1, (N, C, H, W), jnp.float32)
    # deterministic synthetic parameters (weight_norm's v, g and conv bias)
    v = jax.random.normal(k2, (C, C, K, K), jnp.float32) * 0.2
    g = jax.random.uniform(k3, (C,), jnp.float32, minval=0.5, maxval=1.5)
    b = jax.random.normal(k4, (C,), jnp.float32) * 0.1

    ref = jax.block_until_ready(block_forward_ref(x, v, g, b))

    fwd = jax.jit(block_forward)
    out = jax.block_until_ready(fwd(x, v, g, b))
    assert out.shape == (N, C, H, W)
    np.testing.assert_allclose(np.asarray(out), np.asarray(ref),
                               rtol=1e-3, atol=1e-3)         # all-f32 kernel

    # rectangular image + odd batch (exercises generality of the halo/shift
    # scheme and a 3-step grid)
    x2 = jax.random.normal(k4, (3, C, 8, 24), jnp.float32)
    ref2 = block_forward_ref(x2, v, g, b)
    out2 = jax.block_until_ready(fwd(x2, v, g, b))
    np.testing.assert_allclose(np.asarray(out2), np.asarray(ref2),
                               rtol=1e-3, atol=1e-3)

    print("KERNEL_OK")
</pallas_src>

<mosaic_0001>
module attributes {stable_mosaic.version = 11 : i64} {
  func.func @block_kernel(%arg0: i32, %arg1: memref<1x4x256xf32, #tpu.memory_space<vmem>>, %arg2: memref<9x4x4xf32, #tpu.memory_space<vmem>>, %arg3: memref<4x1xf32, #tpu.memory_space<vmem>>, %arg4: memref<1x4x256xf32, #tpu.memory_space<vmem>>, %arg5: memref<4x290xf32, #tpu.memory_space<vmem>>) attributes {dimension_semantics = [#tpu.dimension_semantics<parallel>], iteration_bounds = array<i64: 2>, scalar_prefetch = 0 : i64, scratch_operands = 1 : i64, tpu.core_type = #tpu.core_type<tc>, window_params = [{transform_indices = @transform_0, window_bounds = array<i64: 1, 4, 256>}, {pipeline_mode = #tpu.pipeline_mode<synchronous>, transform_indices = @transform_1, window_bounds = array<i64: 9, 4, 4>}, {pipeline_mode = #tpu.pipeline_mode<synchronous>, transform_indices = @transform_2, window_bounds = array<i64: 4, 1>}, {transform_indices = @transform_3, window_bounds = array<i64: 1, 4, 256>}]} {
    %c0 = arith.constant 0 : index
    %c0_0 = arith.constant 0 : index
    %c0_1 = arith.constant 0 : index
    %0 = vector.load %arg1[%c0, %c0_0, %c0_1] : memref<1x4x256xf32, #tpu.memory_space<vmem>>, vector<1x4x256xf32>
    %1 = vector.shape_cast %0 : vector<1x4x256xf32> to vector<4x256xf32>
    %cst = arith.constant 0.000000e+00 : f32
    %2 = vector.broadcast %cst : f32 to vector<4x256xf32>
    %3 = arith.cmpf ogt, %1, %2 : vector<4x256xf32>
    %cst_2 = arith.constant 0.000000e+00 : f32
    %4 = vector.broadcast %cst_2 : f32 to vector<4x256xf32>
    %5 = arith.minimumf %1, %4 : vector<4x256xf32>
    %6 = math.exp %5 : vector<4x256xf32>
    %cst_3 = arith.constant 1.000000e+00 : f32
    %7 = vector.broadcast %cst_3 : f32 to vector<4x256xf32>
    %8 = arith.subf %6, %7 : vector<4x256xf32>
    %9 = arith.select %3, %1, %8 : vector<4x256xi1>, vector<4x256xf32>
    %cst_4 = arith.constant 0.000000e+00 : f32
    %10 = vector.broadcast %cst_4 : f32 to vector<4x290xf32>
    %c0_5 = arith.constant 0 : index
    %c0_6 = arith.constant 0 : index
    %11 = vector.load %arg5[%c0_5, %c0_6] : memref<4x290xf32, #tpu.memory_space<vmem>>, vector<4x290xf32>
    tpu.vector_store %arg5[%c0_5, %c0_6], %10 {strides = array<i32>} : memref<4x290xf32, #tpu.memory_space<vmem>>, vector<4x290xf32>,
    %c0_7 = arith.constant 0 : index
    %c17 = arith.constant 17 : index
    %12 = vector.load %arg5[%c0_7, %c17] : memref<4x290xf32, #tpu.memory_space<vmem>>, vector<4x256xf32>
    tpu.vector_store %arg5[%c0_7, %c17], %9 {strides = array<i32>} : memref<4x290xf32, #tpu.memory_space<vmem>>, vector<4x256xf32>,
    %c0_8 = arith.constant 0 : index
    %c0_9 = arith.constant 0 : index
    %13 = vector.load %arg5[%c0_8, %c0_9] : memref<4x290xf32, #tpu.memory_space<vmem>>, vector<4x290xf32>
    %14 = tpu.iota {dimensions = array<i32: 1>} : vector<4x256xi32>
    %c16_i32 = arith.constant 16 : i32
    %c0_i32 = arith.constant 0 : i32
    %15 = arith.cmpi eq, %c16_i32, %c0_i32 : i32
    %c1_i32 = arith.constant 1 : i32
    %16 = arith.select %15, %c1_i32, %c16_i32 : i32
    %17 = vector.broadcast %16 : i32 to vector<4x256xi32>
    %18 = arith.remsi %14, %17 : vector<4x256xi32>
    %c0_i32_10 = arith.constant 0 : i32
    %19 = vector.broadcast %c0_i32_10 : i32 to vector<4x256xi32>
    %20 = arith.cmpi ne, %18, %19 : vector<4x256xi32>
    %c0_i32_11 = arith.constant 0 : i32
    %21 = vector.broadcast %c0_i32_11 : i32 to vector<4x256xi32>
    %22 = arith.cmpi slt, %18, %21 : vector<4x256xi32>
    %c0_i32_12 = arith.constant 0 : i32
    %23 = arith.cmpi slt, %16, %c0_i32_12 : i32
    %24 = vector.broadcast %23 : i1 to vector<4x256xi1>
    %25 = vector.broadcast %24 : vector<4x256xi1> to vector<4x256xi1>
    %26 = arith.xori %22, %25 : vector<4x256xi1>
    %27 = arith.andi %26, %20 : vector<4x256xi1>
    %28 = vector.broadcast %16 : i32 to vector<4x256xi32>
    %29 = arith.addi %18, %28 : vector<4x256xi32>
    %30 = arith.select %27, %29, %18 : vector<4x256xi1>, vector<4x256xi32>
    %cst_13 = arith.constant 0.000000e+00 : f32
    %31 = vector.broadcast %cst_13 : f32 to vector<4x256xf32>
    %32 = vector.extract_strided_slice %13 {offsets = [0, 0], sizes = [4, 256], strides = [1, 1]} : vector<4x290xf32> to vector<4x256xf32>
    %c0_i32_14 = arith.constant 0 : i32
    %33 = vector.broadcast %c0_i32_14 : i32 to vector<4x256xi32>
    %34 = arith.cmpi sgt, %30, %33 : vector<4x256xi32>
    %cst_15 = arith.constant 0.000000e+00 : f32
    %35 = vector.broadcast %cst_15 : f32 to vector<4x256xf32>
    %36 = arith.select %34, %32, %35 : vector<4x256xi1>, vector<4x256xf32>
    %c0_16 = arith.constant 0 : index
    %c0_17 = arith.constant 0 : index
    %c0_18 = arith.constant 0 : index
    %37 = vector.load %arg2[%c0_16, %c0_17, %c0_18] : memref<9x4x4xf32, #tpu.memory_space<vmem>>, vector<1x4x4xf32>
    %38 = vector.shape_cast %37 : vector<1x4x4xf32> to vector<4x4xf32>
    %39 = vector.shape_cast %38 : vector<4x4xf32> to vector<4x4x1xf32>
    %40 = vector.shape_cast %36 : vector<4x256xf32> to vector<1x4x256xf32>
    %41 = vector.broadcast %39 : vector<4x4x1xf32> to vector<4x4x256xf32>
    %42 = vector.broadcast %40 : vector<1x4x256xf32> to vector<4x4x256xf32>
    %43 = arith.mulf %41, %42 : vector<4x4x256xf32>
    %cst_19 = arith.constant dense<0.000000e+00> : vector<4x256xf32>
    %44 = vector.multi_reduction <add>, %43, %cst_19 [1] : vector<4x4x256xf32> to vector<4x256xf32>
    %45 = arith.addf %31, %44 : vector<4x256xf32>
    %46 = vector.extract_strided_slice %13 {offsets = [0, 1], sizes = [4, 256], strides = [1, 1]} : vector<4x290xf32> to vector<4x256xf32>
    %c1 = arith.constant 1 : index
    %c0_20 = arith.constant 0 : index
    %c0_21 = arith.constant 0 : index
    %47 = vector.load %arg2[%c1, %c0_20, %c0_21] : memref<9x4x4xf32, #tpu.memory_space<vmem>>, vector<1x4x4xf32>
    %48 = vector.shape_cast %47 : vector<1x4x4xf32> to vector<4x4xf32>
    %49 = vector.shape_cast %48 : vector<4x4xf32> to vector<4x4x1xf32>
    %50 = vector.shape_cast %46 : vector<4x256xf32> to vector<1x4x256xf32>
    %51 = vector.broadcast %49 : vector<4x4x1xf32> to vector<4x4x256xf32>
    %52 = vector.broadcast %50 : vector<1x4x256xf32> to vector<4x4x256xf32>
    %53 = arith.mulf %51, %52 : vector<4x4x256xf32>
    %cst_22 = arith.constant dense<0.000000e+00> : vector<4x256xf32>
    %54 = vector.multi_reduction <add>, %53, %cst_22 [1] : vector<4x4x256xf32> to vector<4x256xf32>
    %55 = arith.addf %45, %54 : vector<4x256xf32>
    %56 = vector.extract_strided_slice %13 {offsets = [0, 2], sizes = [4, 256], strides = [1, 1]} : vector<4x290xf32> to vector<4x256xf32>
    %c15_i32 = arith.constant 15 : i32
    %57 = vector.broadcast %c15_i32 : i32 to vector<4x256xi32>
    %58 = arith.cmpi slt, %30, %57 : vector<4x256xi32>
    %cst_23 = arith.constant 0.000000e+00 : f32
    %59 = vector.broadcast %cst_23 : f32 to vector<4x256xf32>
    %60 = arith.select %58, %56, %59 : vector<4x256xi1>, vector<4x256xf32>
    %c2 = arith.constant 2 : index
    %c0_24 = arith.constant 0 : index
    %c0_25 = arith.constant 0 : index
    %61 = vector.load %arg2[%c2, %c0_24, %c0_25] : memref<9x4x4xf32, #tpu.memory_space<vmem>>, vector<1x4x4xf32>
    %62 = vector.shape_cast %61 : vector<1x4x4xf32> to vector<4x4xf32>
    %63 = vector.shape_cast %62 : vector<4x4xf32> to vector<4x4x1xf32>
    %64 = vector.shape_cast %60 : vector<4x256xf32> to vector<1x4x256xf32>
    %65 = vector.broadcast %63 : vector<4x4x1xf32> to vector<4x4x256xf32>
    %66 = vector.broadcast %64 : vector<1x4x256xf32> to vector<4x4x256xf32>
    %67 = arith.mulf %65, %66 : vector<4x4x256xf32>
    %cst_26 = arith.constant dense<0.000000e+00> : vector<4x256xf32>
    %68 = vector.multi_reduction <add>, %67, %cst_26 [1] : vector<4x4x256xf32> to vector<4x256xf32>
    %69 = arith.addf %55, %68 : vector<4x256xf32>
    %70 = vector.extract_strided_slice %13 {offsets = [0, 16], sizes = [4, 256], strides = [1, 1]} : vector<4x290xf32> to vector<4x256xf32>
    %c0_i32_27 = arith.constant 0 : i32
    %71 = vector.broadcast %c0_i32_27 : i32 to vector<4x256xi32>
    %72 = arith.cmpi sgt, %30, %71 : vector<4x256xi32>
    %cst_28 = arith.constant 0.000000e+00 : f32
    %73 = vector.broadcast %cst_28 : f32 to vector<4x256xf32>
    %74 = arith.select %72, %70, %73 : vector<4x256xi1>, vector<4x256xf32>
    %c3 = arith.constant 3 : index
    %c0_29 = arith.constant 0 : index
    %c0_30 = arith.constant 0 : index
    %75 = vector.load %arg2[%c3, %c0_29, %c0_30] : memref<9x4x4xf32, #tpu.memory_space<vmem>>, vector<1x4x4xf32>
    %76 = vector.shape_cast %75 : vector<1x4x4xf32> to vector<4x4xf32>
    %77 = vector.shape_cast %76 : vector<4x4xf32> to vector<4x4x1xf32>
    %78 = vector.shape_cast %74 : vector<4x256xf32> to vector<1x4x256xf32>
    %79 = vector.broadcast %77 : vector<4x4x1xf32> to vector<4x4x256xf32>
    %80 = vector.broadcast %78 : vector<1x4x256xf32> to vector<4x4x256xf32>
    %81 = arith.mulf %79, %80 : vector<4x4x256xf32>
    %cst_31 = arith.constant dense<0.000000e+00> : vector<4x256xf32>
    %82 = vector.multi_reduction <add>, %81, %cst_31 [1] : vector<4x4x256xf32> to vector<4x256xf32>
    %83 = arith.addf %69, %82 : vector<4x256xf32>
    %84 = vector.extract_strided_slice %13 {offsets = [0, 17], sizes = [4, 256], strides = [1, 1]} : vector<4x290xf32> to vector<4x256xf32>
    %c4 = arith.constant 4 : index
    %c0_32 = arith.constant 0 : index
    %c0_33 = arith.constant 0 : index
    %85 = vector.load %arg2[%c4, %c0_32, %c0_33] : memref<9x4x4xf32, #tpu.memory_space<vmem>>, vector<1x4x4xf32>
    %86 = vector.shape_cast %85 : vector<1x4x4xf32> to vector<4x4xf32>
    %87 = vector.shape_cast %86 : vector<4x4xf32> to vector<4x4x1xf32>
    %88 = vector.shape_cast %84 : vector<4x256xf32> to vector<1x4x256xf32>
    %89 = vector.broadcast %87 : vector<4x4x1xf32> to vector<4x4x256xf32>
    %90 = vector.broadcast %88 : vector<1x4x256xf32> to vector<4x4x256xf32>
    %91 = arith.mulf %89, %90 : vector<4x4x256xf32>
    %cst_34 = arith.constant dense<0.000000e+00> : vector<4x256xf32>
    %92 = vector.multi_reduction <add>, %91, %cst_34 [1] : vector<4x4x256xf32> to vector<4x256xf32>
    %93 = arith.addf %83, %92 : vector<4x256xf32>
    %94 = vector.extract_strided_slice %13 {offsets = [0, 18], sizes = [4, 256], strides = [1, 1]} : vector<4x290xf32> to vector<4x256xf32>
    %c15_i32_35 = arith.constant 15 : i32
    %95 = vector.broadcast %c15_i32_35 : i32 to vector<4x256xi32>
    %96 = arith.cmpi slt, %30, %95 : vector<4x256xi32>
    %cst_36 = arith.constant 0.000000e+00 : f32
    %97 = vector.broadcast %cst_36 : f32 to vector<4x256xf32>
    %98 = arith.select %96, %94, %97 : vector<4x256xi1>, vector<4x256xf32>
    %c5 = arith.constant 5 : index
    %c0_37 = arith.constant 0 : index
    %c0_38 = arith.constant 0 : index
    %99 = vector.load %arg2[%c5, %c0_37, %c0_38] : memref<9x4x4xf32, #tpu.memory_space<vmem>>, vector<1x4x4xf32>
    %100 = vector.shape_cast %99 : vector<1x4x4xf32> to vector<4x4xf32>
    %101 = vector.shape_cast %100 : vector<4x4xf32> to vector<4x4x1xf32>
    %102 = vector.shape_cast %98 : vector<4x256xf32> to vector<1x4x256xf32>
    %103 = vector.broadcast %101 : vector<4x4x1xf32> to vector<4x4x256xf32>
    %104 = vector.broadcast %102 : vector<1x4x256xf32> to vector<4x4x256xf32>
    %105 = arith.mulf %103, %104 : vector<4x4x256xf32>
    %cst_39 = arith.constant dense<0.000000e+00> : vector<4x256xf32>
    %106 = vector.multi_reduction <add>, %105, %cst_39 [1] : vector<4x4x256xf32> to vector<4x256xf32>
    %107 = arith.addf %93, %106 : vector<4x256xf32>
    %108 = vector.extract_strided_slice %13 {offsets = [0, 32], sizes = [4, 256], strides = [1, 1]} : vector<4x290xf32> to vector<4x256xf32>
    %c0_i32_40 = arith.constant 0 : i32
    %109 = vector.broadcast %c0_i32_40 : i32 to vector<4x256xi32>
    %110 = arith.cmpi sgt, %30, %109 : vector<4x256xi32>
    %cst_41 = arith.constant 0.000000e+00 : f32
    %111 = vector.broadcast %cst_41 : f32 to vector<4x256xf32>
    %112 = arith.select %110, %108, %111 : vector<4x256xi1>, vector<4x256xf32>
    %c6 = arith.constant 6 : index
    %c0_42 = arith.constant 0 : index
    %c0_43 = arith.constant 0 : index
    %113 = vector.load %arg2[%c6, %c0_42, %c0_43] : memref<9x4x4xf32, #tpu.memory_space<vmem>>, vector<1x4x4xf32>
    %114 = vector.shape_cast %113 : vector<1x4x4xf32> to vector<4x4xf32>
    %115 = vector.shape_cast %114 : vector<4x4xf32> to vector<4x4x1xf32>
    %116 = vector.shape_cast %112 : vector<4x256xf32> to vector<1x4x256xf32>
    %117 = vector.broadcast %115 : vector<4x4x1xf32> to vector<4x4x256xf32>
    %118 = vector.broadcast %116 : vector<1x4x256xf32> to vector<4x4x256xf32>
    %119 = arith.mulf %117, %118 : vector<4x4x256xf32>
    %cst_44 = arith.constant dense<0.000000e+00> : vector<4x256xf32>
    %120 = vector.multi_reduction <add>, %119, %cst_44 [1] : vector<4x4x256xf32> to vector<4x256xf32>
    %121 = arith.addf %107, %120 : vector<4x256xf32>
    %122 = vector.extract_strided_slice %13 {offsets = [0, 33], sizes = [4, 256], strides = [1, 1]} : vector<4x290xf32> to vector<4x256xf32>
    %c7 = arith.constant 7 : index
    %c0_45 = arith.constant 0 : index
    %c0_46 = arith.constant 0 : index
    %123 = vector.load %arg2[%c7, %c0_45, %c0_46] : memref<9x4x4xf32, #tpu.memory_space<vmem>>, vector<1x4x4xf32>
    %124 = vector.shape_cast %123 : vector<1x4x4xf32> to vector<4x4xf32>
    %125 = vector.shape_cast %124 : vector<4x4xf32> to vector<4x4x1xf32>
    %126 = vector.shape_cast %122 : vector<4x256xf32> to vector<1x4x256xf32>
    %127 = vector.broadcast %125 : vector<4x4x1xf32> to vector<4x4x256xf32>
    %128 = vector.broadcast %126 : vector<1x4x256xf32> to vector<4x4x256xf32>
    %129 = arith.mulf %127, %128 : vector<4x4x256xf32>
    %cst_47 = arith.constant dense<0.000000e+00> : vector<4x256xf32>
    %130 = vector.multi_reduction <add>, %129, %cst_47 [1] : vector<4x4x256xf32> to vector<4x256xf32>
    %131 = arith.addf %121, %130 : vector<4x256xf32>
    %132 = vector.extract_strided_slice %13 {offsets = [0, 34], sizes = [4, 256], strides = [1, 1]} : vector<4x290xf32> to vector<4x256xf32>
    %c15_i32_48 = arith.constant 15 : i32
    %133 = vector.broadcast %c15_i32_48 : i32 to vector<4x256xi32>
    %134 = arith.cmpi slt, %30, %133 : vector<4x256xi32>
    %cst_49 = arith.constant 0.000000e+00 : f32
    %135 = vector.broadcast %cst_49 : f32 to vector<4x256xf32>
    %136 = arith.select %134, %132, %135 : vector<4x256xi1>, vector<4x256xf32>
    %c8 = arith.constant 8 : index
    %c0_50 = arith.constant 0 : index
    %c0_51 = arith.constant 0 : index
    %137 = vector.load %arg2[%c8, %c0_50, %c0_51] : memref<9x4x4xf32, #tpu.memory_space<vmem>>, vector<1x4x4xf32>
    %138 = vector.shape_cast %137 : vector<1x4x4xf32> to vector<4x4xf32>
    %139 = vector.shape_cast %138 : vector<4x4xf32> to vector<4x4x1xf32>
    %140 = vector.shape_cast %136 : vector<4x256xf32> to vector<1x4x256xf32>
    %141 = vector.broadcast %139 : vector<4x4x1xf32> to vector<4x4x256xf32>
    %142 = vector.broadcast %140 : vector<1x4x256xf32> to vector<4x4x256xf32>
    %143 = arith.mulf %141, %142 : vector<4x4x256xf32>
    %cst_52 = arith.constant dense<0.000000e+00> : vector<4x256xf32>
    %144 = vector.multi_reduction <add>, %143, %cst_52 [1] : vector<4x4x256xf32> to vector<4x256xf32>
    %145 = arith.addf %131, %144 : vector<4x256xf32>
    %146 = arith.addf %1, %145 : vector<4x256xf32>
    %c0_53 = arith.constant 0 : index
    %c0_54 = arith.constant 0 : index
    %147 = vector.load %arg3[%c0_53, %c0_54] : memref<4x1xf32, #tpu.memory_space<vmem>>, vector<4x1xf32>
    %148 = vector.broadcast %147 : vector<4x1xf32> to vector<4x256xf32>
    %149 = arith.addf %146, %148 : vector<4x256xf32>
    %c0_55 = arith.constant 0 : index
    %c0_56 = arith.constant 0 : index
    %c0_57 = arith.constant 0 : index
    %150 = vector.load %arg4[%c0_55, %c0_56, %c0_57] : memref<1x4x256xf32, #tpu.memory_space<vmem>>, vector<1x4x256xf32>
    %151 = vector.shape_cast %150 : vector<1x4x256xf32> to vector<4x256xf32>
    %152 = vector.shape_cast %149 : vector<4x256xf32> to vector<1x4x256xf32>
    tpu.vector_store %arg4[%c0_55, %c0_56, %c0_57], %152 {strides = array<i32>} : memref<1x4x256xf32, #tpu.memory_space<vmem>>, vector<1x4x256xf32>,
    return
  }
  func.func @transform_0(%arg0: i32) -> (i32, i32, i32) {
    %c0_i32 = arith.constant 0 : i32
    %c0_i32_0 = arith.constant 0 : i32
    %c0_i32_1 = arith.constant 0 : i32
    return %arg0, %c0_i32, %c0_i32_0 : i32, i32, i32
  }
  func.func @transform_1(%arg0: i32) -> (i32, i32, i32) {
    %c0_i32 = arith.constant 0 : i32
    %c0_i32_0 = arith.constant 0 : i32
    %c0_i32_1 = arith.constant 0 : i32
    %c0_i32_2 = arith.constant 0 : i32
    return %c0_i32, %c0_i32_0, %c0_i32_1 : i32, i32, i32
  }
  func.func @transform_2(%arg0: i32) -> (i32, i32) {
    %c0_i32 = arith.constant 0 : i32
    %c0_i32_0 = arith.constant 0 : i32
    %c0_i32_1 = arith.constant 0 : i32
    return %c0_i32, %c0_i32_0 : i32, i32
  }
  func.func @transform_3(%arg0: i32) -> (i32, i32, i32) {
    %c0_i32 = arith.constant 0 : i32
    %c0_i32_0 = arith.constant 0 : i32
    %c0_i32_1 = arith.constant 0 : i32
    return %arg0, %c0_i32, %c0_i32_0 : i32, i32, i32
  }
}

</mosaic_0001>

<llo_original>
// kernel: block_forward.1
$region0: #{block_forward.1}
  #allocation0 [shape = 'u32[]', space=smem, size = 0x4, offset = 0x4, fixed_abs, tag = 'smem constant byte address 0x4 - core index']
  #allocation1 [shape = 'u32[144,128]{1,0:T(1,128)}', space=vmem, size = 0x12000, scoped, tag = 'internal scratch']
  #allocation2 [shape = 'f32[4,290]{1,0:T(4,128)}', space=vmem, size = 0x1800, scoped, tag = 'scratch operand']
  %s0 = inlined_call_operand.vmem [shape: f32[2,4,256], index: 0, kind: input, shape index: {}]
  %s1 = inlined_call_operand.vmem [shape: f32[9,4,4], index: 1, kind: input, shape index: {}]
  %s2 = inlined_call_operand.vmem [shape: f32[4,1], index: 2, kind: input, shape index: {}]
  %s3 = inlined_call_operand.vmem [shape: f32[2,4,256], index: 3, kind: output, shape index: {}]
  %s4 = sld [smem:[#allocation0]]
  $region45: #{block_forward.1} parent=0
    _
  %s6 = ssub.s32 1, %s4
  %s7 = scalar_select 0, %s6, %s4
  loop: start=0, step=1, limit=4
  $region2: #{block_forward.1} parent=0 // loop_pre_header
    _
  $region3: #{block_forward.1} parent=0 // loop_header
    %s9 = sphi 0, %s13
    %p10 = scmp.ge.s32.totalorder %s9, 4
    %s19 = sphi 0, %s21
    %s22 = sphi 0, %s19
    %s23 = sphi 0, %s22
    %s39 = sphi 0, %s23
    %s43 = sphi 0, %s43
    %s45 = sphi 0, %s43
    %s46 = sphi 0, %s45
    %s60 = sphi 0, %s46
    %s64 = sphi 0, %s64
    %s66 = sphi 0, %s64
    %s67 = sphi 0, %s66
    %s81 = sphi 0, %s67
    %s87 = sphi 0, %s89
    %s90 = sphi 0, %s87
    %s91 = sphi 0, %s90
    %s107 = sphi 0, %s91
  $region4: #{block_forward.1} parent=0 // loop_header_branch
    %12 = sbr.rel (%p10) target = $region8
  $region5: #{block_forward.1} parent=0 // loop_body
    %s14 = ssub.s32 %s9, 1
    %s15 = ssub.s32 %s9, 2
    %s16 = sadd.s32 %s9, 1
    %s17 = ssub.s32 %s9, %s16
    %p18 = scmp.eq.s32.totalorder %s17, 0
    %s20 = sadd.s32 %s19, 1
    %s21 = scalar_select %p18, %s19, %s20
    %p24 = pneg %p18
    %p25 = scmp.eq.s32.totalorder %s9, 1
    %p26 = por %p24, %p25
    %p27 = scmp.ne.s32.totalorder %s19, %s22
    %p28 = scmp.eq.s32.totalorder %s9, 0
    %p29 = por %p27, %p28
    %p30 = scmp.ne.s32.totalorder %s19, %s22
    %p31 = scmp.eq.s32.totalorder %s14, 1
    %p32 = por %p30, %p31
    %p33 = scmp.ne.s32.totalorder %s22, %s23
    %p34 = scmp.eq.s32.totalorder %s14, 0
    %p35 = por %p33, %p34
    %p36 = scmp.ne.s32.totalorder %s22, %s23
    %p37 = scmp.eq.s32.totalorder %s15, 1
    %p38 = por %p36, %p37
    %p40 = scmp.ne.s32.totalorder %s23, %s39
    %p41 = scmp.eq.s32.totalorder %s15, 0
    %p42 = por %p40, %p41
    %s44 = sadd.s32 %s43, 1
    %p47 = scmp.eq.s32.totalorder %s9, 1
    %p48 = scmp.ne.s32.totalorder %s43, %s45
    %p49 = scmp.eq.s32.totalorder %s9, 0
    %p50 = por %p48, %p49
    %p51 = scmp.ne.s32.totalorder %s43, %s45
    %p52 = scmp.eq.s32.totalorder %s14, 1
    %p53 = por %p51, %p52
    %p54 = scmp.ne.s32.totalorder %s45, %s46
    %p55 = scmp.eq.s32.totalorder %s14, 0
    %p56 = por %p54, %p55
    %p57 = scmp.ne.s32.totalorder %s45, %s46
    %p58 = scmp.eq.s32.totalorder %s15, 1
    %p59 = por %p57, %p58
    %p61 = scmp.ne.s32.totalorder %s46, %s60
    %p62 = scmp.eq.s32.totalorder %s15, 0
    %p63 = por %p61, %p62
    %s65 = sadd.s32 %s64, 1
    %p68 = scmp.eq.s32.totalorder %s9, 1
    %p69 = scmp.ne.s32.totalorder %s64, %s66
    %p70 = scmp.eq.s32.totalorder %s9, 0
    %p71 = por %p69, %p70
    %p72 = scmp.ne.s32.totalorder %s64, %s66
    %p73 = scmp.eq.s32.totalorder %s14, 1
    %p74 = por %p72, %p73
    %p75 = scmp.ne.s32.totalorder %s66, %s67
    %p76 = scmp.eq.s32.totalorder %s14, 0
    %p77 = por %p75, %p76
    %p78 = scmp.ne.s32.totalorder %s66, %s67
    %p79 = scmp.eq.s32.totalorder %s15, 1
    %p80 = por %p78, %p79
    %p82 = scmp.ne.s32.totalorder %s67, %s81
    %p83 = scmp.eq.s32.totalorder %s15, 0
    %p84 = por %p82, %p83
    %s85 = ssub.s32 %s9, %s16
    %p86 = scmp.eq.s32.totalorder %s85, 0
    %s88 = sadd.s32 %s87, 1
    %s89 = scalar_select %p86, %s87, %s88
    %p92 = pneg %p86
    %p93 = scmp.eq.s32.totalorder %s9, 1
    %p94 = por %p92, %p93
    %p95 = scmp.ne.s32.totalorder %s87, %s90
    %p96 = scmp.eq.s32.totalorder %s9, 0
    %p97 = por %p95, %p96
    %p98 = scmp.ne.s32.totalorder %s87, %s90
    %p99 = scmp.eq.s32.totalorder %s14, 1
    %p100 = por %p98, %p99
    %p101 = scmp.ne.s32.totalorder %s90, %s91
    %p102 = scmp.eq.s32.totalorder %s14, 0
    %p103 = por %p101, %p102
    %p104 = scmp.ne.s32.totalorder %s90, %s91
    %p105 = scmp.eq.s32.totalorder %s15, 1
    %p106 = por %p104, %p105
    %p108 = scmp.ne.s32.totalorder %s91, %s107
    %p109 = scmp.eq.s32.totalorder %s15, 0
    %p110 = por %p108, %p109
    %p111 = scmp.le.s32.totalorder 1, %s9
    %p112 = scmp.lt.s32.totalorder %s9, 3
    %p113 = pnand %p111, %p112
    %p114 = pneg %p113
    // Predicated region
    $region9: #{block_forward.1} parent=5 // pred_check
      _
    $region10: #{block_forward.1} parent=5 // pred_check_branch
      %116 = sbr.rel (%p113) target = $region12
    $region11: #{block_forward.1} parent=5 // pred_region
      %s117 = ssub.s32 %s9, 1
      // Predicated region
      $region13: #{block_forward.1} parent=11 // pred_check
        %p118 = pneg %p56
      $region14: #{block_forward.1} parent=11 // pred_check_branch
        %120 = sbr.rel (%p118) target = $region16
      $region15: #{block_forward.1} parent=11 // pred_region
        _
      $region16: #{block_forward.1} parent=11 // pred_fallthru
        _
      // Predicated region
      $region17: #{block_forward.1} parent=11 // pred_check
        %p121 = pneg %p77
      $region18: #{block_forward.1} parent=11 // pred_check_branch
        %123 = sbr.rel (%p121) target = $region20
      $region19: #{block_forward.1} parent=11 // pred_region
        _
      $region20: #{block_forward.1} parent=11 // pred_fallthru
        _
    $region12: #{block_forward.1} parent=5 // pred_fallthru
      _
    %p124 = scmp.lt.s32.totalorder %s9, 2
    // Predicated region
    $region21: #{block_forward.1} parent=5 // pred_check
      %p125 = pneg %p124
    $region22: #{block_forward.1} parent=5 // pred_check_branch
      %127 = sbr.rel (%p125) target = $region24
    $region23: #{block_forward.1} parent=5 // pred_region
      // Predicated region
      $region25: #{block_forward.1} parent=23 // pred_check
        %p128 = pneg %p29
      $region26: #{block_forward.1} parent=23 // pred_check_branch
        %130 = sbr.rel (%p128) target = $region28
      $region27: #{block_forward.1} parent=23 // pred_region
        %p131 = scmp.lt.s32.totalorder %s9, 1
        %s132 = scalar_select %p131, %s9, 1
        %s133 = smul.addr %s132, 2
        %s134 = smul.addr %s133, 4
        %s135 = scalar_lea.vmem %s0, %s134
      $region28: #{block_forward.1} parent=23 // pred_fallthru
        _
    $region24: #{block_forward.1} parent=5 // pred_fallthru
      _
    %p136 = scmp.le.s32.totalorder 1, %s9
    %p137 = scmp.lt.s32.totalorder %s9, 3
    %p138 = pnand %p136, %p137
    %p139 = pneg %p138
    // Predicated region
    $region29: #{block_forward.1} parent=5 // pred_check
      _
    $region30: #{block_forward.1} parent=5 // pred_check_branch
      %141 = sbr.rel (%p138) target = $region32
    $region31: #{block_forward.1} parent=5 // pred_region
      %s142 = ssub.s32 %s9, 1
      %p143 = scmp.lt.s32.totalorder %s14, 1
      %s144 = scalar_select %p143, %s14, 1
      %s145 = smul.addr %s144, 2
      %s146 = smul.addr %s145, 4
      %s147 = scalar_lea.vmem %s0, %s146
      %p148 = pneg %p35
      %p149 = pneg %p32
      %p150 = pneg %p56
      %p151 = pneg %p53
      %p152 = pneg %p77
      %p153 = pneg %p74
      %p154 = pneg %p103
      %p155 = pneg %p100
      %p156 = scmp.lt.s32.totalorder %s14, 1
      %s157 = scalar_select %p156, %s14, 1
      %s158 = smul.addr %s157, 2
      %s159 = smul.addr %s158, 4
      %s160 = scalar_lea.vmem %s3, %s159
      %p161 = scmp.lt.s32.totalorder %s14, 1
      %s162 = scalar_select %p161, %s14, 1
      %s163 = smul.addr %s162, 2
      %s164 = smul.addr %s163, 4
      %s165 = scalar_lea.vmem %s0, %s164
      %p166 = scmp.lt.s32.totalorder %s14, 1
      %s167 = scalar_select %p166, %s14, 1
      %s168 = smul.addr %s167, 2
      %s169 = smul.addr %s168, 4
      %s170 = scalar_lea.vmem %s3, %s169
      %v171 = vld [vmem:[%s165] sm:$0xff]
      %vm172 = vcmp.gt.f32.partialorder %v171, 0.0
      %v173 = vmin.f32 %v171, 0.0
      %v174 = vmul.f32 %v173, 1.442695
      %v175 = vpow.pop %v174
      %v176 = vsub.f32 %v175, 1.0
      %v177 = vsel %vm172, %v171, %v176
      %178 = vst [vmem:[#allocation2] sm:$0xff] 0.0
      %vm179 = vcmask 273408
      %180 = vst.msk [vmem:[#allocation2 + $0x8] sm:$0xf] %vm179, 0.0
      %182 = vrot.lane.b32.xlu0 %v177, 17
      %v183 = vpop.permute.xlu0 %182
      %v184 = vrot.slane %v183, 4
      %vm185 = vcmask 138240
      %v186 = vsel %vm185, %v184, %v183
      %vm189 = vcmask 1043592
      %vm190 = vcmask 1047556
      %vm191 = vmor %vm190, %vm189
      %192 = vst.msk [vmem:[#allocation2] sm:$0xff] %vm191, %v186
      %vm193 = vcmask 134144
      %194 = vst.msk [vmem:[#allocation2 + $0x8] sm:$0xf] %vm193, %v184
      %v195 = vld [vmem:[#allocation2] sm:$0xff]
      %v196 = vld [vmem:[#allocation2 + $0x8] sm:$0xf]
      %v197 = vlaneseq
      %v198 = vand.u32 %v197, 127
      %v199 = vadd.s32 %v198, 128
      %vm200 = vcmp.lt.s32.totalorder %v198, 0
      %v201 = vsub.s32 0, %v198
      %v202 = vsel %vm200, %v201, %v198
      %v203 = vshrl.u32 %v202, 4
      %v204 = vand.u32 %v202, 15
      %v205 = vsub.s32 0, %v204
      %v206 = vsel %vm200, %v205, %v204
      %vm207 = vcmp.lt.s32.totalorder %v199, 0
      %v208 = vsub.s32 0, %v199
      %v209 = vsel %vm207, %v208, %v199
      %v210 = vshrl.u32 %v209, 4
      %v211 = vand.u32 %v209, 15
      %v212 = vsub.s32 0, %v211
      %v213 = vsel %vm207, %v212, %v211
      %vm214 = vcmp.ne.s32.totalorder %v206, 0
      %vm215 = vcmp.ne.s32.totalorder %v213, 0
      %vm216 = vcmp.lt.s32.totalorder %v206, 0
      %vm217 = vcmp.lt.s32.totalorder %v213, 0
      %vm218 = vmand %vm216, %vm214
      %vm219 = vmand %vm217, %vm215
      %v220 = vadd.s32 %v206, 16
      %v221 = vadd.s32 %v213, 16
      %v222 = vsel %vm218, %v220, %v206
      %v223 = vsel %vm219, %v221, %v213
      %vm224 = vcmp.gt.s32.totalorder %v222, 0
      %vm225 = vcmp.gt.s32.totalorder %v223, 0
      %v227 = vcombine.high %v195, %v195
      %v229 = vsel %vm224, %v195, 0.0
      %v230 = vsel %vm225, %v227, 0.0
      %v231 = vld [vmem:[%s1] sm:$0xf]
      %v232 = vlaneseq
      %v233 = vshrl.u32 %v232, 7
      %v234 = vsub.s32 0, %v233
      %v235 = vrot.slane %v231, %v234
      %237 = vbcast.lane.b32.xlu0 %v235, 256
      %v238 = vpop.permute.xlu0 %237
      %v239 = vlaneseq
      %v240 = vshrl.u32 %v239, 7
      %v241 = vsub.s32 1, %v240
      %v242 = vrot.slane %v231, %v241
      %244 = vbcast.lane.b32.xlu0 %v242, 256
      %v245 = vpop.permute.xlu0 %244
      %v246 = vlaneseq
      %v247 = vshrl.u32 %v246, 7
      %v248 = vsub.s32 2, %v247
      %v249 = vrot.slane %v231, %v248
      %251 = vbcast.lane.b32.xlu0 %v249, 256
      %v252 = vpop.permute.xlu0 %251
      %v253 = vlaneseq
      %v254 = vshrl.u32 %v253, 7
      %v255 = vsub.s32 3, %v254
      %v256 = vrot.slane %v231, %v255
      %258 = vbcast.lane.b32.xlu0 %v256, 256
      %v259 = vpop.permute.xlu0 %258
      %v260 = vmul.f32 %v238, %v229
      %v261 = vmul.f32 %v238, %v230
      %v262 = vmul.f32 %v245, %v229
      %v263 = vmul.f32 %v245, %v230
      %v264 = vmul.f32 %v252, %v229
      %v265 = vmul.f32 %v252, %v230
      %v266 = vmul.f32 %v259, %v229
      %v267 = vmul.f32 %v259, %v230
      %vm268 = vcmask 1043456
      %v269 = vsel %vm268, %v260, 0.0
      %v270 = vrot.slane %v269, 4
      %v271 = vadd.f32 %v269, %v270
      %v272 = vrot.slane %v271, 2
      %v273 = vadd.f32 %v271, %v272
      %v274 = vrot.slane %v273, 1
      %v275 = vadd.f32 %v273, %v274
      %v276 = vsel %vm268, %v261, 0.0
      %v277 = vrot.slane %v276, 4
      %v278 = vadd.f32 %v276, %v277
      %v279 = vrot.slane %v278, 2
      %v280 = vadd.f32 %v278, %v279
      %v281 = vrot.slane %v280, 1
      %v282 = vadd.f32 %v280, %v281
      %v283 = vsel %vm268, %v262, 0.0
      %v284 = vrot.slane %v283, 4
      %v285 = vadd.f32 %v283, %v284
      %v286 = vrot.slane %v285, 2
      %v287 = vadd.f32 %v285, %v286
      %v288 = vrot.slane %v287, 1
      %v289 = vadd.f32 %v287, %v288
      %v290 = vsel %vm268, %v263, 0.0
      %v291 = vrot.slane %v290, 4
      %v292 = vadd.f32 %v290, %v291
      %v293 = vrot.slane %v292, 2
      %v294 = vadd.f32 %v292, %v293
      %v295 = vrot.slane %v294, 1
      %v296 = vadd.f32 %v294, %v295
      %v297 = vsel %vm268, %v264, 0.0
      %v298 = vrot.slane %v297, 4
      %v299 = vadd.f32 %v297, %v298
      %v300 = vrot.slane %v299, 2
      %v301 = vadd.f32 %v299, %v300
      %v302 = vrot.slane %v301, 1
      %v303 = vadd.f32 %v301, %v302
      %v304 = vsel %vm268, %v265, 0.0
      %v305 = vrot.slane %v304, 4
      %v306 = vadd.f32 %v304, %v305
      %v307 = vrot.slane %v306, 2
      %v308 = vadd.f32 %v306, %v307
      %v309 = vrot.slane %v308, 1
      %v310 = vadd.f32 %v308, %v309
      %v311 = vsel %vm268, %v266, 0.0
      %v312 = vrot.slane %v311, 4
      %v313 = vadd.f32 %v311, %v312
      %v314 = vrot.slane %v313, 2
      %v315 = vadd.f32 %v313, %v314
      %v316 = vrot.slane %v315, 1
      %v317 = vadd.f32 %v315, %v316
      %v318 = vsel %vm268, %v267, 0.0
      %v319 = vrot.slane %v318, 4
      %v320 = vadd.f32 %v318, %v319
      %v321 = vrot.slane %v320, 2
      %v322 = vadd.f32 %v320, %v321
      %v323 = vrot.slane %v322, 1
      %v324 = vadd.f32 %v322, %v323
      %v325 = vadd.f32 %v275, 0.0
      %v326 = vadd.f32 %v282, 0.0
      %v327 = vadd.f32 %v289, 0.0
      %v328 = vadd.f32 %v296, 0.0
      %v329 = vadd.f32 %v303, 0.0
      %v330 = vadd.f32 %v310, 0.0
      %v331 = vadd.f32 %v317, 0.0
      %v332 = vadd.f32 %v324, 0.0
      %s333 = scalar_lea.vmem %s1, 4
      %v334 = vld [vmem:[%s333] sm:$0xf]
      %v335 = vlaneseq
      %v336 = vshrl.u32 %v335, 7
      %v337 = vsub.s32 0, %v336
      %v338 = vrot.slane %v334, %v337
      %340 = vbcast.lane.b32.xlu0 %v338, 256
      %v341 = vpop.permute.xlu0 %340
      %v342 = vlaneseq
      %v343 = vshrl.u32 %v342, 7
      %v344 = vsub.s32 1, %v343
      %v345 = vrot.slane %v334, %v344
      %347 = vbcast.lane.b32.xlu0 %v345, 256
      %v348 = vpop.permute.xlu0 %347
      %v349 = vlaneseq
      %v350 = vshrl.u32 %v349, 7
      %v351 = vsub.s32 2, %v350
      %v352 = vrot.slane %v334, %v351
      %354 = vbcast.lane.b32.xlu0 %v352, 256
      %v355 = vpop.permute.xlu0 %354
      %v356 = vlaneseq
      %v357 = vshrl.u32 %v356, 7
      %v358 = vsub.s32 3, %v357
      %v359 = vrot.slane %v334, %v358
      %361 = vbcast.lane.b32.xlu0 %v359, 256
      %v362 = vpop.permute.xlu0 %361
      %364 = vrot.lane.b32.xlu0 %v195, 127
      %v365 = vpop.permute.xlu0 %364
      %366 = vrot.lane.b32.xlu0 %v227, 127
      %v367 = vpop.permute.xlu0 %366
      %368 = vrot.lane.b32.xlu0 %v196, 127
      %v369 = vpop.permute.xlu0 %368
      %vm370 = vcmask 1039360
      %v371 = vsel %vm370, %v365, %v367
      %v372 = vsel %vm370, %v367, %v369
      %v375 = vmul.f32 %v341, %v371
      %v376 = vmul.f32 %v341, %v372
      %v377 = vmul.f32 %v348, %v371
      %v378 = vmul.f32 %v348, %v372
      %v379 = vmul.f32 %v355, %v371
      %v380 = vmul.f32 %v355, %v372
      %v381 = vmul.f32 %v362, %v371
      %v382 = vmul.f32 %v362, %v372
      %v383 = vsel %vm268, %v375, 0.0
      %v384 = vrot.slane %v383, 4
      %v385 = vadd.f32 %v383, %v384
      %v386 = vrot.slane %v385, 2
      %v387 = vadd.f32 %v385, %v386
      %v388 = vrot.slane %v387, 1
      %v389 = vadd.f32 %v387, %v388
      %v390 = vsel %vm268, %v376, 0.0
      %v391 = vrot.slane %v390, 4
      %v392 = vadd.f32 %v390, %v391
      %v393 = vrot.slane %v392, 2
      %v394 = vadd.f32 %v392, %v393
      %v395 = vrot.slane %v394, 1
      %v396 = vadd.f32 %v394, %v395
      %v397 = vsel %vm268, %v377, 0.0
      %v398 = vrot.slane %v397, 4
      %v399 = vadd.f32 %v397, %v398
      %v400 = vrot.slane %v399, 2
      %v401 = vadd.f32 %v399, %v400
      %v402 = vrot.slane %v401, 1
      %v403 = vadd.f32 %v401, %v402
      %v404 = vsel %vm268, %v378, 0.0
      %v405 = vrot.slane %v404, 4
      %v406 = vadd.f32 %v404, %v405
      %v407 = vrot.slane %v406, 2
      %v408 = vadd.f32 %v406, %v407
      %v409 = vrot.slane %v408, 1
      %v410 = vadd.f32 %v408, %v409
      %v411 = vsel %vm268, %v379, 0.0
      %v412 = vrot.slane %v411, 4
      %v413 = vadd.f32 %v411, %v412
      %v414 = vrot.slane %v413, 2
      %v415 = vadd.f32 %v413, %v414
      %v416 = vrot.slane %v415, 1
      %v417 = vadd.f32 %v415, %v416
      %v418 = vsel %vm268, %v380, 0.0
      %v419 = vrot.slane %v418, 4
      %v420 = vadd.f32 %v418, %v419
      %v421 = vrot.slane %v420, 2
      %v422 = vadd.f32 %v420, %v421
      %v423 = vrot.slane %v422, 1
      %v424 = vadd.f32 %v422, %v423
      %v425 = vsel %vm268, %v381, 0.0
      %v426 = vrot.slane %v425, 4
      %v427 = vadd.f32 %v425, %v426
      %v428 = vrot.slane %v427, 2
      %v429 = vadd.f32 %v427, %v428
      %v430 = vrot.slane %v429, 1
      %v431 = vadd.f32 %v429, %v430
      %v432 = vsel %vm268, %v382, 0.0
      %v433 = vrot.slane %v432, 4
      %v434 = vadd.f32 %v432, %v433
      %v435 = vrot.slane %v434, 2
      %v436 = vadd.f32 %v434, %v435
      %v437 = vrot.slane %v436, 1
      %v438 = vadd.f32 %v436, %v437
      %v439 = vadd.f32 %v325, %v389
      %v440 = vadd.f32 %v326, %v396
      %v441 = vadd.f32 %v327, %v403
      %v442 = vadd.f32 %v328, %v410
      %v443 = vadd.f32 %v329, %v417
      %v444 = vadd.f32 %v330, %v424
      %v445 = vadd.f32 %v331, %v431
      %v446 = vadd.f32 %v332, %v438
      %vm447 = vcmp.lt.s32.totalorder %v222, 15
      %vm448 = vcmp.lt.s32.totalorder %v223, 15
      %449 = vrot.lane.b32.xlu0 %v195, 126
      %v450 = vpop.permute.xlu0 %449
      %451 = vrot.lane.b32.xlu0 %v227, 126
      %v452 = vpop.permute.xlu0 %451
      %453 = vrot.lane.b32.xlu0 %v196, 126
      %v454 = vpop.permute.xlu0 %453
      %vm455 = vcmask 1031168
      %v456 = vsel %vm455, %v450, %v452
      %v457 = vsel %vm455, %v452, %v454
      %v460 = vsel %vm447, %v456, 0.0
      %v461 = vsel %vm448, %v457, 0.0
      %s462 = scalar_lea.vmem %s1, 8
      %v463 = vld [vmem:[%s462] sm:$0xf]
      %v464 = vlaneseq
      %v465 = vshrl.u32 %v464, 7
      %v466 = vsub.s32 0, %v465
      %v467 = vrot.slane %v463, %v466
      %469 = vbcast.lane.b32.xlu0 %v467, 256
      %v470 = vpop.permute.xlu0 %469
      %v471 = vlaneseq
      %v472 = vshrl.u32 %v471, 7
      %v473 = vsub.s32 1, %v472
      %v474 = vrot.slane %v463, %v473
      %476 = vbcast.lane.b32.xlu0 %v474, 256
      %v477 = vpop.permute.xlu0 %476
      %v478 = vlaneseq
      %v479 = vshrl.u32 %v478, 7
      %v480 = vsub.s32 2, %v479
      %v481 = vrot.slane %v463, %v480
      %483 = vbcast.lane.b32.xlu0 %v481, 256
      %v484 = vpop.permute.xlu0 %483
      %v485 = vlaneseq
      %v486 = vshrl.u32 %v485, 7
      %v487 = vsub.s32 3, %v486
      %v488 = vrot.slane %v463, %v487
      %490 = vbcast.lane.b32.xlu0 %v488, 256
      %v491 = vpop.permute.xlu0 %490
      %v492 = vmul.f32 %v470, %v460
      %v493 = vmul.f32 %v470, %v461
      %v494 = vmul.f32 %v477, %v460
      %v495 = vmul.f32 %v477, %v461
      %v496 = vmul.f32 %v484, %v460
      %v497 = vmul.f32 %v484, %v461
      %v498 = vmul.f32 %v491, %v460
      %v499 = vmul.f32 %v491, %v461
      %v500 = vsel %vm268, %v492, 0.0
      %v501 = vrot.slane %v500, 4
      %v502 = vadd.f32 %v500, %v501
      %v503 = vrot.slane %v502, 2
      %v504 = vadd.f32 %v502, %v503
      %v505 = vrot.slane %v504, 1
      %v506 = vadd.f32 %v504, %v505
      %v507 = vsel %vm268, %v493, 0.0
      %v508 = vrot.slane %v507, 4
      %v509 = vadd.f32 %v507, %v508
      %v510 = vrot.slane %v509, 2
      %v511 = vadd.f32 %v509, %v510
      %v512 = vrot.slane %v511, 1
      %v513 = vadd.f32 %v511, %v512
      %v514 = vsel %vm268, %v494, 0.0
      %v515 = vrot.slane %v514, 4
      %v516 = vadd.f32 %v514, %v515
      %v517 = vrot.slane %v516, 2
      %v518 = vadd.f32 %v516, %v517
      %v519 = vrot.slane %v518, 1
      %v520 = vadd.f32 %v518, %v519
      %v521 = vsel %vm268, %v495, 0.0
      %v522 = vrot.slane %v521, 4
      %v523 = vadd.f32 %v521, %v522
      %v524 = vrot.slane %v523, 2
      %v525 = vadd.f32 %v523, %v524
      %v526 = vrot.slane %v525, 1
      %v527 = vadd.f32 %v525, %v526
      %v528 = vsel %vm268, %v496, 0.0
      %v529 = vrot.slane %v528, 4
      %v530 = vadd.f32 %v528, %v529
      %v531 = vrot.slane %v530, 2
      %v532 = vadd.f32 %v530, %v531
      %v533 = vrot.slane %v532, 1
      %v534 = vadd.f32 %v532, %v533
      %v535 = vsel %vm268, %v497, 0.0
      %v536 = vrot.slane %v535, 4
      %v537 = vadd.f32 %v535, %v536
      %v538 = vrot.slane %v537, 2
      %v539 = vadd.f32 %v537, %v538
      %v540 = vrot.slane %v539, 1
      %v541 = vadd.f32 %v539, %v540
      %v542 = vsel %vm268, %v498, 0.0
      %v543 = vrot.slane %v542, 4
      %v544 = vadd.f32 %v542, %v543
      %v545 = vrot.slane %v544, 2
      %v546 = vadd.f32 %v544, %v545
      %v547 = vrot.slane %v546, 1
      %v548 = vadd.f32 %v546, %v547
      %v549 = vsel %vm268, %v499, 0.0
      %v550 = vrot.slane %v549, 4
      %v551 = vadd.f32 %v549, %v550
      %v552 = vrot.slane %v551, 2
      %v553 = vadd.f32 %v551, %v552
      %v554 = vrot.slane %v553, 1
      %v555 = vadd.f32 %v553, %v554
      %v556 = vadd.f32 %v439, %v506
      %v557 = vadd.f32 %v440, %v513
      %v558 = vadd.f32 %v441, %v520
      %v559 = vadd.f32 %v442, %v527
      %v560 = vadd.f32 %v443, %v534
      %v561 = vadd.f32 %v444, %v541
      %v562 = vadd.f32 %v445, %v548
      %v563 = vadd.f32 %v446, %v555
      %564 = vrot.lane.b32.xlu0 %v195, 112
      %v565 = vpop.permute.xlu0 %564
      %566 = vrot.lane.b32.xlu0 %v227, 112
      %v567 = vpop.permute.xlu0 %566
      %568 = vrot.lane.b32.xlu0 %v196, 112
      %v569 = vpop.permute.xlu0 %568
      %vm570 = vcmask 916480
      %v571 = vsel %vm570, %v565, %v567
      %v572 = vsel %vm570, %v567, %v569
      %v575 = vsel %vm224, %v571, 0.0
      %v576 = vsel %vm225, %v572, 0.0
      %s577 = scalar_lea.vmem %s1, 12
      %v578 = vld [vmem:[%s577] sm:$0xf]
      %v579 = vlaneseq
      %v580 = vshrl.u32 %v579, 7
      %v581 = vsub.s32 0, %v580
      %v582 = vrot.slane %v578, %v581
      %584 = vbcast.lane.b32.xlu0 %v582, 256
      %v585 = vpop.permute.xlu0 %584
      %v586 = vlaneseq
      %v587 = vshrl.u32 %v586, 7
      %v588 = vsub.s32 1, %v587
      %v589 = vrot.slane %v578, %v588
      %591 = vbcast.lane.b32.xlu0 %v589, 256
      %v592 = vpop.permute.xlu0 %591
      %v593 = vlaneseq
      %v594 = vshrl.u32 %v593, 7
      %v595 = vsub.s32 2, %v594
      %v596 = vrot.slane %v578, %v595
      %598 = vbcast.lane.b32.xlu0 %v596, 256
      %v599 = vpop.permute.xlu0 %598
      %v600 = vlaneseq
      %v601 = vshrl.u32 %v600, 7
      %v602 = vsub.s32 3, %v601
      %v603 = vrot.slane %v578, %v602
      %605 = vbcast.lane.b32.xlu0 %v603, 256
      %v606 = vpop.permute.xlu0 %605
      %v607 = vmul.f32 %v585, %v575
      %v608 = vmul.f32 %v585, %v576
      %v609 = vmul.f32 %v592, %v575
      %v610 = vmul.f32 %v592, %v576
      %v611 = vmul.f32 %v599, %v575
      %v612 = vmul.f32 %v599, %v576
      %v613 = vmul.f32 %v606, %v575
      %v614 = vmul.f32 %v606, %v576
      %v615 = vsel %vm268, %v607, 0.0
      %v616 = vrot.slane %v615, 4
      %v617 = vadd.f32 %v615, %v616
      %v618 = vrot.slane %v617, 2
      %v619 = vadd.f32 %v617, %v618
      %v620 = vrot.slane %v619, 1
      %v621 = vadd.f32 %v619, %v620
      %v622 = vsel %vm268, %v608, 0.0
      %v623 = vrot.slane %v622, 4
      %v624 = vadd.f32 %v622, %v623
      %v625 = vrot.slane %v624, 2
      %v626 = vadd.f32 %v624, %v625
      %v627 = vrot.slane %v626, 1
      %v628 = vadd.f32 %v626, %v627
      %v629 = vsel %vm268, %v609, 0.0
      %v630 = vrot.slane %v629, 4
      %v631 = vadd.f32 %v629, %v630
      %v632 = vrot.slane %v631, 2
      %v633 = vadd.f32 %v631, %v632
      %v634 = vrot.slane %v633, 1
      %v635 = vadd.f32 %v633, %v634
      %v636 = vsel %vm268, %v610, 0.0
      %v637 = vrot.slane %v636, 4
      %v638 = vadd.f32 %v636, %v637
      %v639 = vrot.slane %v638, 2
      %v640 = vadd.f32 %v638, %v639
      %v641 = vrot.slane %v640, 1
      %v642 = vadd.f32 %v640, %v641
      %v643 = vsel %vm268, %v611, 0.0
      %v644 = vrot.slane %v643, 4
      %v645 = vadd.f32 %v643, %v644
      %v646 = vrot.slane %v645, 2
      %v647 = vadd.f32 %v645, %v646
      %v648 = vrot.slane %v647, 1
      %v649 = vadd.f32 %v647, %v648
      %v650 = vsel %vm268, %v612, 0.0
      %v651 = vrot.slane %v650, 4
      %v652 = vadd.f32 %v650, %v651
      %v653 = vrot.slane %v652, 2
      %v654 = vadd.f32 %v652, %v653
      %v655 = vrot.slane %v654, 1
      %v656 = vadd.f32 %v654, %v655
      %v657 = vsel %vm268, %v613, 0.0
      %v658 = vrot.slane %v657, 4
      %v659 = vadd.f32 %v657, %v658
      %v660 = vrot.slane %v659, 2
      %v661 = vadd.f32 %v659, %v660
      %v662 = vrot.slane %v661, 1
      %v663 = vadd.f32 %v661, %v662
      %v664 = vsel %vm268, %v614, 0.0
      %v665 = vrot.slane %v664, 4
      %v666 = vadd.f32 %v664, %v665
      %v667 = vrot.slane %v666, 2
      %v668 = vadd.f32 %v666, %v667
      %v669 = vrot.slane %v668, 1
      %v670 = vadd.f32 %v668, %v669
      %v671 = vadd.f32 %v556, %v621
      %v672 = vadd.f32 %v557, %v628
      %v673 = vadd.f32 %v558, %v635
      %v674 = vadd.f32 %v559, %v642
      %v675 = vadd.f32 %v560, %v649
      %v676 = vadd.f32 %v561, %v656
      %v677 = vadd.f32 %v562, %v663
      %v678 = vadd.f32 %v563, %v670
      %s679 = scalar_lea.vmem %s1, 16
      %v680 = vld [vmem:[%s679] sm:$0xf]
      %v681 = vlaneseq
      %v682 = vshrl.u32 %v681, 7
      %v683 = vsub.s32 0, %v682
      %v684 = vrot.slane %v680, %v683
      %686 = vbcast.lane.b32.xlu0 %v684, 256
      %v687 = vpop.permute.xlu0 %686
      %v688 = vlaneseq
      %v689 = vshrl.u32 %v688, 7
      %v690 = vsub.s32 1, %v689
      %v691 = vrot.slane %v680, %v690
      %693 = vbcast.lane.b32.xlu0 %v691, 256
      %v694 = vpop.permute.xlu0 %693
      %v695 = vlaneseq
      %v696 = vshrl.u32 %v695, 7
      %v697 = vsub.s32 2, %v696
      %v698 = vrot.slane %v680, %v697
      %700 = vbcast.lane.b32.xlu0 %v698, 256
      %v701 = vpop.permute.xlu0 %700
      %v702 = vlaneseq
      %v703 = vshrl.u32 %v702, 7
      %v704 = vsub.s32 3, %v703
      %v705 = vrot.slane %v680, %v704
      %707 = vbcast.lane.b32.xlu0 %v705, 256
      %v708 = vpop.permute.xlu0 %707
      %709 = vrot.lane.b32.xlu0 %v195, 111
      %v710 = vpop.permute.xlu0 %709
      %711 = vrot.lane.b32.xlu0 %v227, 111
      %v712 = vpop.permute.xlu0 %711
      %713 = vrot.lane.b32.xlu0 %v196, 111
      %v714 = vpop.permute.xlu0 %713
      %vm715 = vcmask 908288
      %v716 = vsel %vm715, %v710, %v712
      %v717 = vsel %vm715, %v712, %v714
      %v720 = vmul.f32 %v687, %v716
      %v721 = vmul.f32 %v687, %v717
      %v722 = vmul.f32 %v694, %v716
      %v723 = vmul.f32 %v694, %v717
      %v724 = vmul.f32 %v701, %v716
      %v725 = vmul.f32 %v701, %v717
      %v726 = vmul.f32 %v708, %v716
      %v727 = vmul.f32 %v708, %v717
      %v728 = vsel %vm268, %v720, 0.0
      %v729 = vrot.slane %v728, 4
      %v730 = vadd.f32 %v728, %v729
      %v731 = vrot.slane %v730, 2
      %v732 = vadd.f32 %v730, %v731
      %v733 = vrot.slane %v732, 1
      %v734 = vadd.f32 %v732, %v733
      %v735 = vsel %vm268, %v721, 0.0
      %v736 = vrot.slane %v735, 4
      %v737 = vadd.f32 %v735, %v736
      %v738 = vrot.slane %v737, 2
      %v739 = vadd.f32 %v737, %v738
      %v740 = vrot.slane %v739, 1
      %v741 = vadd.f32 %v739, %v740
      %v742 = vsel %vm268, %v722, 0.0
      %v743 = vrot.slane %v742, 4
      %v744 = vadd.f32 %v742, %v743
      %v745 = vrot.slane %v744, 2
      %v746 = vadd.f32 %v744, %v745
      %v747 = vrot.slane %v746, 1
      %v748 = vadd.f32 %v746, %v747
      %v749 = vsel %vm268, %v723, 0.0
      %v750 = vrot.slane %v749, 4
      %v751 = vadd.f32 %v749, %v750
      %v752 = vrot.slane %v751, 2
      %v753 = vadd.f32 %v751, %v752
      %v754 = vrot.slane %v753, 1
      %v755 = vadd.f32 %v753, %v754
      %v756 = vsel %vm268, %v724, 0.0
      %v757 = vrot.slane %v756, 4
      %v758 = vadd.f32 %v756, %v757
      %v759 = vrot.slane %v758, 2
      %v760 = vadd.f32 %v758, %v759
      %v761 = vrot.slane %v760, 1
      %v762 = vadd.f32 %v760, %v761
      %v763 = vsel %vm268, %v725, 0.0
      %v764 = vrot.slane %v763, 4
      %v765 = vadd.f32 %v763, %v764
      %v766 = vrot.slane %v765, 2
      %v767 = vadd.f32 %v765, %v766
      %v768 = vrot.slane %v767, 1
      %v769 = vadd.f32 %v767, %v768
      %v770 = vsel %vm268, %v726, 0.0
      %v771 = vrot.slane %v770, 4
      %v772 = vadd.f32 %v770, %v771
      %v773 = vrot.slane %v772, 2
      %v774 = vadd.f32 %v772, %v773
      %v775 = vrot.slane %v774, 1
      %v776 = vadd.f32 %v774, %v775
      %v777 = vsel %vm268, %v727, 0.0
      %v778 = vrot.slane %v777, 4
      %v779 = vadd.f32 %v777, %v778
      %v780 = vrot.slane %v779, 2
      %v781 = vadd.f32 %v779, %v780
      %v782 = vrot.slane %v781, 1
      %v783 = vadd.f32 %v781, %v782
      %v784 = vadd.f32 %v671, %v734
      %v785 = vadd.f32 %v672, %v741
      %v786 = vadd.f32 %v673, %v748
      %v787 = vadd.f32 %v674, %v755
      %v788 = vadd.f32 %v675, %v762
      %v789 = vadd.f32 %v676, %v769
      %v790 = vadd.f32 %v677, %v776
      %v791 = vadd.f32 %v678, %v783
      %792 = vrot.lane.b32.xlu0 %v195, 110
      %v793 = vpop.permute.xlu0 %792
      %794 = vrot.lane.b32.xlu0 %v227, 110
      %v795 = vpop.permute.xlu0 %794
      %796 = vrot.lane.b32.xlu0 %v196, 110
      %v797 = vpop.permute.xlu0 %796
      %vm798 = vcmask 900096
      %v799 = vsel %vm798, %v793, %v795
      %v800 = vsel %vm798, %v795, %v797
      %v803 = vsel %vm447, %v799, 0.0
      %v804 = vsel %vm448, %v800, 0.0
      %s805 = scalar_lea.vmem %s1, 20
      %v806 = vld [vmem:[%s805] sm:$0xf]
      %v807 = vlaneseq
      %v808 = vshrl.u32 %v807, 7
      %v809 = vsub.s32 0, %v808
      %v810 = vrot.slane %v806, %v809
      %812 = vbcast.lane.b32.xlu0 %v810, 256
      %v813 = vpop.permute.xlu0 %812
      %v814 = vlaneseq
      %v815 = vshrl.u32 %v814, 7
      %v816 = vsub.s32 1, %v815
      %v817 = vrot.slane %v806, %v816
      %819 = vbcast.lane.b32.xlu0 %v817, 256
      %v820 = vpop.permute.xlu0 %819
      %v821 = vlaneseq
      %v822 = vshrl.u32 %v821, 7
      %v823 = vsub.s32 2, %v822
      %v824 = vrot.slane %v806, %v823
      %826 = vbcast.lane.b32.xlu0 %v824, 256
      %v827 = vpop.permute.xlu0 %826
      %v828 = vlaneseq
      %v829 = vshrl.u32 %v828, 7
      %v830 = vsub.s32 3, %v829
      %v831 = vrot.slane %v806, %v830
      %833 = vbcast.lane.b32.xlu0 %v831, 256
      %v834 = vpop.permute.xlu0 %833
      %v835 = vmul.f32 %v813, %v803
      %v836 = vmul.f32 %v813, %v804
      %v837 = vmul.f32 %v820, %v803
      %v838 = vmul.f32 %v820, %v804
      %v839 = vmul.f32 %v827, %v803
      %v840 = vmul.f32 %v827, %v804
      %v841 = vmul.f32 %v834, %v803
      %v842 = vmul.f32 %v834, %v804
      %v843 = vsel %vm268, %v835, 0.0
      %v844 = vrot.slane %v843, 4
      %v845 = vadd.f32 %v843, %v844
      %v846 = vrot.slane %v845, 2
      %v847 = vadd.f32 %v845, %v846
      %v848 = vrot.slane %v847, 1
      %v849 = vadd.f32 %v847, %v848
      %v850 = vsel %vm268, %v836, 0.0
      %v851 = vrot.slane %v850, 4
      %v852 = vadd.f32 %v850, %v851
      %v853 = vrot.slane %v852, 2
      %v854 = vadd.f32 %v852, %v853
      %v855 = vrot.slane %v854, 1
      %v856 = vadd.f32 %v854, %v855
      %v857 = vsel %vm268, %v837, 0.0
      %v858 = vrot.slane %v857, 4
      %v859 = vadd.f32 %v857, %v858
      %v860 = vrot.slane %v859, 2
      %v861 = vadd.f32 %v859, %v860
      %v862 = vrot.slane %v861, 1
      %v863 = vadd.f32 %v861, %v862
      %v864 = vsel %vm268, %v838, 0.0
      %v865 = vrot.slane %v864, 4
      %v866 = vadd.f32 %v864, %v865
      %v867 = vrot.slane %v866, 2
      %v868 = vadd.f32 %v866, %v867
      %v869 = vrot.slane %v868, 1
      %v870 = vadd.f32 %v868, %v869
      %v871 = vsel %vm268, %v839, 0.0
      %v872 = vrot.slane %v871, 4
      %v873 = vadd.f32 %v871, %v872
      %v874 = vrot.slane %v873, 2
      %v875 = vadd.f32 %v873, %v874
      %v876 = vrot.slane %v875, 1
      %v877 = vadd.f32 %v875, %v876
      %v878 = vsel %vm268, %v840, 0.0
      %v879 = vrot.slane %v878, 4
      %v880 = vadd.f32 %v878, %v879
      %v881 = vrot.slane %v880, 2
      %v882 = vadd.f32 %v880, %v881
      %v883 = vrot.slane %v882, 1
      %v884 = vadd.f32 %v882, %v883
      %v885 = vsel %vm268, %v841, 0.0
      %v886 = vrot.slane %v885, 4
      %v887 = vadd.f32 %v885, %v886
      %v888 = vrot.slane %v887, 2
      %v889 = vadd.f32 %v887, %v888
      %v890 = vrot.slane %v889, 1
      %v891 = vadd.f32 %v889, %v890
      %v892 = vsel %vm268, %v842, 0.0
      %v893 = vrot.slane %v892, 4
      %v894 = vadd.f32 %v892, %v893
      %v895 = vrot.slane %v894, 2
      %v896 = vadd.f32 %v894, %v895
      %v897 = vrot.slane %v896, 1
      %v898 = vadd.f32 %v896, %v897
      %v899 = vadd.f32 %v784, %v849
      %v900 = vadd.f32 %v785, %v856
      %v901 = vadd.f32 %v786, %v863
      %v902 = vadd.f32 %v787, %v870
      %v903 = vadd.f32 %v788, %v877
      %v904 = vadd.f32 %v789, %v884
      %v905 = vadd.f32 %v790, %v891
      %v906 = vadd.f32 %v791, %v898
      %907 = vrot.lane.b32.xlu0 %v195, 96
      %v908 = vpop.permute.xlu0 %907
      %909 = vrot.lane.b32.xlu0 %v227, 96
      %v910 = vpop.permute.xlu0 %909
      %911 = vrot.lane.b32.xlu0 %v196, 96
      %v912 = vpop.permute.xlu0 %911
      %vm913 = vcmask 785408
      %v914 = vsel %vm913, %v908, %v910
      %v915 = vsel %vm913, %v910, %v912
      %v918 = vsel %vm224, %v914, 0.0
      %v919 = vsel %vm225, %v915, 0.0
      %s920 = scalar_lea.vmem %s1, 24
      %v921 = vld [vmem:[%s920] sm:$0xf]
      %v922 = vlaneseq
      %v923 = vshrl.u32 %v922, 7
      %v924 = vsub.s32 0, %v923
      %v925 = vrot.slane %v921, %v924
      %927 = vbcast.lane.b32.xlu0 %v925, 256
      %v928 = vpop.permute.xlu0 %927
      %v929 = vlaneseq
      %v930 = vshrl.u32 %v929, 7
      %v931 = vsub.s32 1, %v930
      %v932 = vrot.slane %v921, %v931
      %934 = vbcast.lane.b32.xlu0 %v932, 256
      %v935 = vpop.permute.xlu0 %934
      %v936 = vlaneseq
      %v937 = vshrl.u32 %v936, 7
      %v938 = vsub.s32 2, %v937
      %v939 = vrot.slane %v921, %v938
      %941 = vbcast.lane.b32.xlu0 %v939, 256
      %v942 = vpop.permute.xlu0 %941
      %v943 = vlaneseq
      %v944 = vshrl.u32 %v943, 7
      %v945 = vsub.s32 3, %v944
      %v946 = vrot.slane %v921, %v945
      %948 = vbcast.lane.b32.xlu0 %v946, 256
      %v949 = vpop.permute.xlu0 %948
      %v950 = vmul.f32 %v928, %v918
      %v951 = vmul.f32 %v928, %v919
      %v952 = vmul.f32 %v935, %v918
      %v953 = vmul.f32 %v935, %v919
      %v954 = vmul.f32 %v942, %v918
      %v955 = vmul.f32 %v942, %v919
      %v956 = vmul.f32 %v949, %v918
      %v957 = vmul.f32 %v949, %v919
      %v958 = vsel %vm268, %v950, 0.0
      %v959 = vrot.slane %v958, 4
      %v960 = vadd.f32 %v958, %v959
      %v961 = vrot.slane %v960, 2
      %v962 = vadd.f32 %v960, %v961
      %v963 = vrot.slane %v962, 1
      %v964 = vadd.f32 %v962, %v963
      %v965 = vsel %vm268, %v951, 0.0
      %v966 = vrot.slane %v965, 4
      %v967 = vadd.f32 %v965, %v966
      %v968 = vrot.slane %v967, 2
      %v969 = vadd.f32 %v967, %v968
      %v970 = vrot.slane %v969, 1
      %v971 = vadd.f32 %v969, %v970
      %v972 = vsel %vm268, %v952, 0.0
      %v973 = vrot.slane %v972, 4
      %v974 = vadd.f32 %v972, %v973
      %v975 = vrot.slane %v974, 2
      %v976 = vadd.f32 %v974, %v975
      %v977 = vrot.slane %v976, 1
      %v978 = vadd.f32 %v976, %v977
      %v979 = vsel %vm268, %v953, 0.0
      %v980 = vrot.slane %v979, 4
      %v981 = vadd.f32 %v979, %v980
      %v982 = vrot.slane %v981, 2
      %v983 = vadd.f32 %v981, %v982
      %v984 = vrot.slane %v983, 1
      %v985 = vadd.f32 %v983, %v984
      %v986 = vsel %vm268, %v954, 0.0
      %v987 = vrot.slane %v986, 4
      %v988 = vadd.f32 %v986, %v987
      %v989 = vrot.slane %v988, 2
      %v990 = vadd.f32 %v988, %v989
      %v991 = vrot.slane %v990, 1
      %v992 = vadd.f32 %v990, %v991
      %v993 = vsel %vm268, %v955, 0.0
      %v994 = vrot.slane %v993, 4
      %v995 = vadd.f32 %v993, %v994
      %v996 = vrot.slane %v995, 2
      %v997 = vadd.f32 %v995, %v996
      %v998 = vrot.slane %v997, 1
      %v999 = vadd.f32 %v997, %v998
      %v1000 = vsel %vm268, %v956, 0.0
      %v1001 = vrot.slane %v1000, 4
      %v1002 = vadd.f32 %v1000, %v1001
      %v1003 = vrot.slane %v1002, 2
      %v1004 = vadd.f32 %v1002, %v1003
      %v1005 = vrot.slane %v1004, 1
      %v1006 = vadd.f32 %v1004, %v1005
      %v1007 = vsel %vm268, %v957, 0.0
      %v1008 = vrot.slane %v1007, 4
      %v1009 = vadd.f32 %v1007, %v1008
      %v1010 = vrot.slane %v1009, 2
      %v1011 = vadd.f32 %v1009, %v1010
      %v1012 = vrot.slane %v1011, 1
      %v1013 = vadd.f32 %v1011, %v1012
      %v1014 = vadd.f32 %v899, %v964
      %v1015 = vadd.f32 %v900, %v971
      %v1016 = vadd.f32 %v901, %v978
      %v1017 = vadd.f32 %v902, %v985
      %v1018 = vadd.f32 %v903, %v992
      %v1019 = vadd.f32 %v904, %v999
      %v1020 = vadd.f32 %v905, %v1006
      %v1021 = vadd.f32 %v906, %v1013
      %s1022 = scalar_lea.vmem %s1, 28
      %v1023 = vld [vmem:[%s1022] sm:$0xf]
      %v1024 = vlaneseq
      %v1025 = vshrl.u32 %v1024, 7
      %v1026 = vsub.s32 0, %v1025
      %v1027 = vrot.slane %v1023, %v1026
      %1029 = vbcast.lane.b32.xlu0 %v1027, 256
      %v1030 = vpop.permute.xlu0 %1029
      %v1031 = vlaneseq
      %v1032 = vshrl.u32 %v1031, 7
      %v1033 = vsub.s32 1, %v1032
      %v1034 = vrot.slane %v1023, %v1033
      %1036 = vbcast.lane.b32.xlu0 %v1034, 256
      %v1037 = vpop.permute.xlu0 %1036
      %v1038 = vlaneseq
      %v1039 = vshrl.u32 %v1038, 7
      %v1040 = vsub.s32 2, %v1039
      %v1041 = vrot.slane %v1023, %v1040
      %1043 = vbcast.lane.b32.xlu0 %v1041, 256
      %v1044 = vpop.permute.xlu0 %1043
      %v1045 = vlaneseq
      %v1046 = vshrl.u32 %v1045, 7
      %v1047 = vsub.s32 3, %v1046
      %v1048 = vrot.slane %v1023, %v1047
      %1050 = vbcast.lane.b32.xlu0 %v1048, 256
      %v1051 = vpop.permute.xlu0 %1050
      %1052 = vrot.lane.b32.xlu0 %v195, 95
      %v1053 = vpop.permute.xlu0 %1052
      %1054 = vrot.lane.b32.xlu0 %v227, 95
      %v1055 = vpop.permute.xlu0 %1054
      %1056 = vrot.lane.b32.xlu0 %v196, 95
      %v1057 = vpop.permute.xlu0 %1056
      %vm1058 = vcmask 777216
      %v1059 = vsel %vm1058, %v1053, %v1055
      %v1060 = vsel %vm1058, %v1055, %v1057
      %v1063 = vmul.f32 %v1030, %v1059
      %v1064 = vmul.f32 %v1030, %v1060
      %v1065 = vmul.f32 %v1037, %v1059
      %v1066 = vmul.f32 %v1037, %v1060
      %v1067 = vmul.f32 %v1044, %v1059
      %v1068 = vmul.f32 %v1044, %v1060
      %v1069 = vmul.f32 %v1051, %v1059
      %v1070 = vmul.f32 %v1051, %v1060
      %v1071 = vsel %vm268, %v1063, 0.0
      %v1072 = vrot.slane %v1071, 4
      %v1073 = vadd.f32 %v1071, %v1072
      %v1074 = vrot.slane %v1073, 2
      %v1075 = vadd.f32 %v1073, %v1074
      %v1076 = vrot.slane %v1075, 1
      %v1077 = vadd.f32 %v1075, %v1076
      %v1078 = vsel %vm268, %v1064, 0.0
      %v1079 = vrot.slane %v1078, 4
      %v1080 = vadd.f32 %v1078, %v1079
      %v1081 = vrot.slane %v1080, 2
      %v1082 = vadd.f32 %v1080, %v1081
      %v1083 = vrot.slane %v1082, 1
      %v1084 = vadd.f32 %v1082, %v1083
      %v1085 = vsel %vm268, %v1065, 0.0
      %v1086 = vrot.slane %v1085, 4
      %v1087 = vadd.f32 %v1085, %v1086
      %v1088 = vrot.slane %v1087, 2
      %v1089 = vadd.f32 %v1087, %v1088
      %v1090 = vrot.slane %v1089, 1
      %v1091 = vadd.f32 %v1089, %v1090
      %v1092 = vsel %vm268, %v1066, 0.0
      %v1093 = vrot.slane %v1092, 4
      %v1094 = vadd.f32 %v1092, %v1093
      %v1095 = vrot.slane %v1094, 2
      %v1096 = vadd.f32 %v1094, %v1095
      %v1097 = vrot.slane %v1096, 1
      %v1098 = vadd.f32 %v1096, %v1097
      %v1099 = vsel %vm268, %v1067, 0.0
      %v1100 = vrot.slane %v1099, 4
      %v1101 = vadd.f32 %v1099, %v1100
      %v1102 = vrot.slane %v1101, 2
      %v1103 = vadd.f32 %v1101, %v1102
      %v1104 = vrot.slane %v1103, 1
      %v1105 = vadd.f32 %v1103, %v1104
      %v1106 = vsel %vm268, %v1068, 0.0
      %v1107 = vrot.slane %v1106, 4
      %v1108 = vadd.f32 %v1106, %v1107
      %v1109 = vrot.slane %v1108, 2
      %v1110 = vadd.f32 %v1108, %v1109
      %v1111 = vrot.slane %v1110, 1
      %v1112 = vadd.f32 %v1110, %v1111
      %v1113 = vsel %vm268, %v1069, 0.0
      %v1114 = vrot.slane %v1113, 4
      %v1115 = vadd.f32 %v1113, %v1114
      %v1116 = vrot.slane %v1115, 2
      %v1117 = vadd.f32 %v1115, %v1116
      %v1118 = vrot.slane %v1117, 1
      %v1119 = vadd.f32 %v1117, %v1118
      %v1120 = vsel %vm268, %v1070, 0.0
      %v1121 = vrot.slane %v1120, 4
      %v1122 = vadd.f32 %v1120, %v1121
      %v1123 = vrot.slane %v1122, 2
      %v1124 = vadd.f32 %v1122, %v1123
      %v1125 = vrot.slane %v1124, 1
      %v1126 = vadd.f32 %v1124, %v1125
      %v1127 = vadd.f32 %v1014, %v1077
      %v1128 = vadd.f32 %v1015, %v1084
      %v1129 = vadd.f32 %v1016, %v1091
      %v1130 = vadd.f32 %v1017, %v1098
      %v1131 = vadd.f32 %v1018, %v1105
      %v1132 = vadd.f32 %v1019, %v1112
      %v1133 = vadd.f32 %v1020, %v1119
      %v1134 = vadd.f32 %v1021, %v1126
      %1135 = vrot.lane.b32.xlu0 %v195, 94
      %v1136 = vpop.permute.xlu0 %1135
      %1137 = vrot.lane.b32.xlu0 %v227, 94
      %v1138 = vpop.permute.xlu0 %1137
      %1139 = vrot.lane.b32.xlu0 %v196, 94
      %v1140 = vpop.permute.xlu0 %1139
      %vm1141 = vcmask 769024
      %v1142 = vsel %vm1141, %v1136, %v1138
      %v1143 = vsel %vm1141, %v1138, %v1140
      %v1146 = vsel %vm447, %v1142, 0.0
      %v1147 = vsel %vm448, %v1143, 0.0
      %s1148 = scalar_lea.vmem %s1, 32
      %v1149 = vld [vmem:[%s1148] sm:$0xf]
      %v1150 = vlaneseq
      %v1151 = vshrl.u32 %v1150, 7
      %v1152 = vsub.s32 0, %v1151
      %v1153 = vrot.slane %v1149, %v1152
      %1155 = vbcast.lane.b32.xlu0 %v1153, 256
      %v1156 = vpop.permute.xlu0 %1155
      %v1157 = vlaneseq
      %v1158 = vshrl.u32 %v1157, 7
      %v1159 = vsub.s32 1, %v1158
      %v1160 = vrot.slane %v1149, %v1159
      %1162 = vbcast.lane.b32.xlu0 %v1160, 256
      %v1163 = vpop.permute.xlu0 %1162
      %v1164 = vlaneseq
      %v1165 = vshrl.u32 %v1164, 7
      %v1166 = vsub.s32 2, %v1165
      %v1167 = vrot.slane %v1149, %v1166
      %1169 = vbcast.lane.b32.xlu0 %v1167, 256
      %v1170 = vpop.permute.xlu0 %1169
      %v1171 = vlaneseq
      %v1172 = vshrl.u32 %v1171, 7
      %v1173 = vsub.s32 3, %v1172
      %v1174 = vrot.slane %v1149, %v1173
      %1176 = vbcast.lane.b32.xlu0 %v1174, 256
      %v1177 = vpop.permute.xlu0 %1176
      %v1178 = vmul.f32 %v1156, %v1146
      %v1179 = vmul.f32 %v1156, %v1147
      %v1180 = vmul.f32 %v1163, %v1146
      %v1181 = vmul.f32 %v1163, %v1147
      %v1182 = vmul.f32 %v1170, %v1146
      %v1183 = vmul.f32 %v1170, %v1147
      %v1184 = vmul.f32 %v1177, %v1146
      %v1185 = vmul.f32 %v1177, %v1147
      %v1186 = vsel %vm268, %v1178, 0.0
      %v1187 = vrot.slane %v1186, 4
      %v1188 = vadd.f32 %v1186, %v1187
      %v1189 = vrot.slane %v1188, 2
      %v1190 = vadd.f32 %v1188, %v1189
      %v1191 = vrot.slane %v1190, 1
      %v1192 = vadd.f32 %v1190, %v1191
      %v1193 = vsel %vm268, %v1179, 0.0
      %v1194 = vrot.slane %v1193, 4
      %v1195 = vadd.f32 %v1193, %v1194
      %v1196 = vrot.slane %v1195, 2
      %v1197 = vadd.f32 %v1195, %v1196
      %v1198 = vrot.slane %v1197, 1
      %v1199 = vadd.f32 %v1197, %v1198
      %v1200 = vsel %vm268, %v1180, 0.0
      %v1201 = vrot.slane %v1200, 4
      %v1202 = vadd.f32 %v1200, %v1201
      %v1203 = vrot.slane %v1202, 2
      %v1204 = vadd.f32 %v1202, %v1203
      %v1205 = vrot.slane %v1204, 1
      %v1206 = vadd.f32 %v1204, %v1205
      %v1207 = vsel %vm268, %v1181, 0.0
      %v1208 = vrot.slane %v1207, 4
      %v1209 = vadd.f32 %v1207, %v1208
      %v1210 = vrot.slane %v1209, 2
      %v1211 = vadd.f32 %v1209, %v1210
      %v1212 = vrot.slane %v1211, 1
      %v1213 = vadd.f32 %v1211, %v1212
      %v1214 = vsel %vm268, %v1182, 0.0
      %v1215 = vrot.slane %v1214, 4
      %v1216 = vadd.f32 %v1214, %v1215
      %v1217 = vrot.slane %v1216, 2
      %v1218 = vadd.f32 %v1216, %v1217
      %v1219 = vrot.slane %v1218, 1
      %v1220 = vadd.f32 %v1218, %v1219
      %v1221 = vsel %vm268, %v1183, 0.0
      %v1222 = vrot.slane %v1221, 4
      %v1223 = vadd.f32 %v1221, %v1222
      %v1224 = vrot.slane %v1223, 2
      %v1225 = vadd.f32 %v1223, %v1224
      %v1226 = vrot.slane %v1225, 1
      %v1227 = vadd.f32 %v1225, %v1226
      %v1228 = vsel %vm268, %v1184, 0.0
      %v1229 = vrot.slane %v1228, 4
      %v1230 = vadd.f32 %v1228, %v1229
      %v1231 = vrot.slane %v1230, 2
      %v1232 = vadd.f32 %v1230, %v1231
      %v1233 = vrot.slane %v1232, 1
      %v1234 = vadd.f32 %v1232, %v1233
      %v1235 = vsel %vm268, %v1185, 0.0
      %v1236 = vrot.slane %v1235, 4
      %v1237 = vadd.f32 %v1235, %v1236
      %v1238 = vrot.slane %v1237, 2
      %v1239 = vadd.f32 %v1237, %v1238
      %v1240 = vrot.slane %v1239, 1
      %v1241 = vadd.f32 %v1239, %v1240
      %v1242 = vadd.f32 %v1127, %v1192
      %v1243 = vadd.f32 %v1128, %v1199
      %v1244 = vadd.f32 %v1129, %v1206
      %v1245 = vadd.f32 %v1130, %v1213
      %v1246 = vadd.f32 %v1131, %v1220
      %v1247 = vadd.f32 %v1132, %v1227
      %v1248 = vadd.f32 %v1133, %v1234
      %v1249 = vadd.f32 %v1134, %v1241
      %v1258 = vcombine.low %v1242, %v1243
      %v1259 = vcombine.low %v1244, %v1245
      %v1260 = vcombine.low %v1246, %v1247
      %v1261 = vcombine.low %v1248, %v1249
      %v1262 = vrot.slane %v1259, 7
      %vm1263 = vcmask 1041409
      %v1264 = vsel %vm1263, %v1262, %v1258
      %vm1265 = vcmask 1045509
      %v1266 = vsel %vm1265, %v1262, %v1264
      %v1267 = vrot.slane %v1260, 6
      %vm1268 = vcmask 1042434
      %v1269 = vsel %vm1268, %v1267, %v1266
      %vm1270 = vcmask 1046534
      %v1271 = vsel %vm1270, %v1267, %v1269
      %v1272 = vrot.slane %v1261, 5
      %vm1273 = vcmask 1043459
      %v1274 = vsel %vm1273, %v1272, %v1271
      %vm1275 = vcmask 1047559
      %v1276 = vsel %vm1275, %v1272, %v1274
      %v1278 = vadd.f32 %v171, %v1276
      %v1279 = vld [vmem:[%s2] sm:$0xf]
      %1281 = vset.pattern.permute.xlu0 0
      %1282 = vperm.xlu0 %1281, %v1279
      %v1283 = vpop.permute.xlu0 %1282
      %v1285 = vunpack.c.l.s4 839922192
      %v1286 = vunpack.c.0.s8 %v1285
      %v1287 = vlaneseq
      %v1288 = vshrl.u32 %v1287, 7
      %v1289 = vsub.s32 %v1286, %v1288
      %v1290 = vrot.slane %v1283, %v1289
      %v1292 = vadd.f32 %v1278, %v1290
      %1293 = vst [vmem:[%s170] sm:$0xff] %v1292
      %p1294 = scmp.lt.s32.totalorder %s14, 1
      %s1295 = scalar_select %p1294, %s14, 1
      %s1296 = smul.addr %s1295, 2
      %s1297 = smul.addr %s1296, 4
      %s1298 = scalar_lea.vmem %s3, %s1297
      // Predicated region
      $region33: #{block_forward.1} parent=31 // pred_check
        %p1299 = pneg %p100
      $region34: #{block_forward.1} parent=31 // pred_check_branch
        %1301 = sbr.rel (%p1299) target = $region36
      $region35: #{block_forward.1} parent=31 // pred_region
        _
      $region36: #{block_forward.1} parent=31 // pred_fallthru
        _
    $region32: #{block_forward.1} parent=5 // pred_fallthru
      _
    %p1302 = scmp.le.s32.totalorder 2, %s9
    // Predicated region
    $region37: #{block_forward.1} parent=5 // pred_check
      %p1303 = pneg %p1302
    $region38: #{block_forward.1} parent=5 // pred_check_branch
      %1305 = sbr.rel (%p1303) target = $region40
    $region39: #{block_forward.1} parent=5 // pred_region
      %s1306 = ssub.s32 %s9, 2
      // Predicated region
      $region41: #{block_forward.1} parent=39 // pred_check
        %p1307 = pneg %p106
      $region42: #{block_forward.1} parent=39 // pred_check_branch
        %1309 = sbr.rel (%p1307) target = $region44
      $region43: #{block_forward.1} parent=39 // pred_region
        %p1310 = scmp.lt.s32.totalorder %s15, 1
        %s1311 = scalar_select %p1310, %s15, 1
        %s1312 = smul.addr %s1311, 2
        %s1313 = smul.addr %s1312, 4
        %s1314 = scalar_lea.vmem %s3, %s1313
      $region44: #{block_forward.1} parent=39 // pred_fallthru
        _
    $region40: #{block_forward.1} parent=5 // pred_fallthru
      _
  $region6: #{block_forward.1} parent=0 // loop_footer
    %s13 = sadd.s32 1, %s9
  $region7: #{block_forward.1} parent=0 // loop_footer_branch
    %8 = sbr.rel target = $region3
  $region8: #{block_forward.1} parent=0 // loop_exit
    _

</llo_original>
